<compile_context>
chip_gen: v5e
topology: v5e:2x2
jax: 0.10.0
libtpu: 0.0.40
codegen_flags: <defaults>
</compile_context>

<pallas_src>
import jax
import jax.numpy as jnp
from jax import lax
from jax.experimental import pallas as pl
from jax.experimental.pallas import tpu as pltpu


def _round_up(v, m):
    return (v + m - 1) // m * m


# ---------------------------------------------------------------------------
# Kernel
# ---------------------------------------------------------------------------
def _fcnn_kernel(x_ref, w1_ref, w2_ref, w3_ref, c_ref, o_ref):
    """Fused MLP forward for one batch tile.

    x_ref  : [TB, F_in]  f32    (batch tile; cast to bf16 in-kernel)
    w1_ref : [F_in, HP]  bf16   (layer-1 weight, BN scale folded in)
    w2_ref : [HP, HP]    bf16   (layer-2 weight, BN scale folded; col H2 is a
                                 zero-weight column used as a constant-1 feature)
    w3_ref : [8, HP]     bf16   (head weight row replicated over 8 sublanes;
                                 entry H2 carries the head bias b3)
    c_ref  : [2, HP]     f32    (row 0: layer-1 bias+shift, row 1: layer-2
                                 bias+shift with c[1, H2] == 1.0)
    o_ref  : [1, TB]     f32    (lane-dense logits row)
    """
    # In-kernel cast: f32 HBM traffic for x only once, VPU cast is free filler.
    x = x_ref[...].astype(jnp.bfloat16)

    # Layer 1: (Linear with folded BN) -> ReLU.  MXU matmul, f32 accumulate,
    # f32 VPU epilogue, narrow to bf16 only as the next MXU operand.
    h = jnp.dot(x, w1_ref[...], preferred_element_type=jnp.float32)
    h = jnp.maximum(h + c_ref[0:1, :], 0.0).astype(jnp.bfloat16)

    # Layer 2 (hidden width padded to HP; padded columns stay exactly 0 except
    # the constant-1 bias feature).
    h = jnp.dot(h, w2_ref[...], preferred_element_type=jnp.float32)
    h = jnp.maximum(h + c_ref[1:2, :], 0.0).astype(jnp.bfloat16)

    # Head: logits[b] = sum_j w3[j] * h[b, j]  (b3 rides along via the
    # constant-1 feature).  Contract dim 1 of both operands so no transposed
    # copy of h is materialized; result is a lane-dense [8, TB] of which only
    # row 0 is stored.
    head = lax.dot_general(w3_ref[...], h,
                           dimension_numbers=(((1,), (1,)), ((), ())),
                           preferred_element_type=jnp.float32)   # [8, TB]
    o_ref[...] = head[0:1, :].astype(o_ref.dtype)


# ---------------------------------------------------------------------------
# Wrapper
# ---------------------------------------------------------------------------
def _pick_tile_b(B, cap=2048, min_steps=4):
    """cdiv-style batch tile: largest 128-multiple tile <= cap, preferring at
    least `min_steps` grid steps for large batches (2+ per v7x TensorCore).
    No divisor constraint — awkward batch sizes just get a slightly padded
    last tile instead of collapsing to 128-row tiles."""
    n128 = _round_up(B, 128) // 128          # batch size in 128-row chunks
    cap_chunks = max(1, cap // 128)
    chunks = max(1, min(cap_chunks, pl.cdiv(n128, min_steps)))
    return chunks * 128


def fcnn_forward(x, packed, *, tile_b=None):
    """Fused FCNN forward (eval mode) with a Pallas kernel, tiled over batch."""
    w1, w2, w3, C = packed
    B, F_in = x.shape
    assert w1.shape[0] == F_in

    if tile_b is None:
        tile_b = _pick_tile_b(B)
    assert tile_b % 128 == 0

    # Pad batch to a whole number of tiles (rows are independent; padded rows
    # produce garbage logits that are sliced off).  x keeps its original dtype;
    # the bf16 cast happens inside the kernel.
    B_pad = _round_up(B, tile_b)
    xb = x if B_pad == B else jnp.pad(x, ((0, B_pad - B), (0, 0)))
    grid = (B_pad // tile_b,)

    def rep(shape):
        return pl.BlockSpec(shape, lambda i: tuple(0 for _ in shape))

    grid_spec = pltpu.PrefetchScalarGridSpec(
        num_scalar_prefetch=0,
        grid=grid,
        in_specs=[
            pl.BlockSpec((tile_b, F_in), lambda i: (i, 0)),      # x (batch tiled)
            rep(w1.shape),                                       # W1'
            rep(w2.shape),                                       # W2'
            rep(w3.shape),                                       # head row
            rep(C.shape),                                        # packed biases
        ],
        out_specs=pl.BlockSpec((1, tile_b), lambda i: (0, i)),   # lane-dense logits
    )

    HP = w1.shape[1]
    flops = 2 * B_pad * (F_in * HP + HP * HP + HP)
    bytes_accessed = int(
        xb.size * xb.dtype.itemsize
        + w1.size * w1.dtype.itemsize + w2.size * w2.dtype.itemsize
        + w3.size * w3.dtype.itemsize + C.size * C.dtype.itemsize
        + B_pad * 4)

    logits_row = pl.pallas_call(
        _fcnn_kernel,
        grid_spec=grid_spec,
        out_shape=jax.ShapeDtypeStruct((1, B_pad), jnp.float32),
        compiler_params=pltpu.CompilerParams(
            dimension_semantics=("parallel",),
            vmem_limit_bytes=32 * 1024 * 1024),
        cost_estimate=pl.CostEstimate(
            flops=flops, transcendentals=0, bytes_accessed=bytes_accessed),
    )(xb, w1, w2, w3, C)

    return logits_row.reshape(-1)[:B].reshape(B, 1)


# ---------------------------------------------------------------------------
# Parameter construction / packing (host-side, one-time)
# ---------------------------------------------------------------------------
def init_raw_params(key, input_size, hidden=(128, 64), out_size=1):
    """He-init Linear layers + synthetic BatchNorm affine params / running stats."""
    dims = (input_size,) + tuple(hidden)
    keys = iter(jax.random.split(key, 6 * len(hidden) + 2))
    layers = []
    for li in range(len(hidden)):
        fan_in, fan_out = dims[li], dims[li + 1]
        w = jax.random.normal(next(keys), (fan_in, fan_out), jnp.float32) * (2.0 / fan_in) ** 0.5
        b = jax.random.uniform(next(keys), (fan_out,), jnp.float32,
                               -1.0 / fan_in ** 0.5, 1.0 / fan_in ** 0.5)
        gamma = 1.0 + 0.1 * jax.random.normal(next(keys), (fan_out,), jnp.float32)
        beta = 0.1 * jax.random.normal(next(keys), (fan_out,), jnp.float32)
        rmean = 0.05 * jax.random.normal(next(keys), (fan_out,), jnp.float32)
        rvar = jnp.abs(1.0 + 0.1 * jax.random.normal(next(keys), (fan_out,), jnp.float32))
        layers.append(dict(w=w, b=b, gamma=gamma, beta=beta, mean=rmean, var=rvar))
    fan_in = dims[-1]
    w_out = jax.random.normal(next(keys), (fan_in, out_size), jnp.float32) * (2.0 / fan_in) ** 0.5
    b_out = jax.random.uniform(next(keys), (out_size,), jnp.float32,
                               -1.0 / fan_in ** 0.5, 1.0 / fan_in ** 0.5)
    return dict(layers=layers, w_out=w_out, b_out=b_out)


def pack_params(raw, *, eps=1e-5, weight_dtype=jnp.bfloat16):
    """Fold eval-mode BatchNorm into weights/biases, pad hidden widths to 128
    lanes, and fold the head bias via a constant-1 feature column."""
    l1, l2 = raw["layers"]
    w3, b3 = raw["w_out"], raw["b_out"]              # [H2, 1], [1]
    F_in, H1 = l1["w"].shape
    H2 = l2["w"].shape[1]
    HP = _round_up(max(H1, H2 + 1), 128)             # +1 for the bias feature

    def fold(layer):
        scale = layer["gamma"] * jax.lax.rsqrt(layer["var"] + eps)
        wf = layer["w"] * scale[None, :]
        cf = layer["b"] * scale + (layer["beta"] - layer["mean"] * scale)
        return wf, cf

    w1f, c1 = fold(l1)
    w2f, c2 = fold(l2)

    w1p = jnp.zeros((F_in, HP), jnp.float32).at[:, :H1].set(w1f)
    c1p = jnp.zeros((HP,), jnp.float32).at[:H1].set(c1)
    w2p = jnp.zeros((HP, HP), jnp.float32).at[:H1, :H2].set(w2f)
    c2p = jnp.zeros((HP,), jnp.float32).at[:H2].set(c2).at[H2].set(1.0)
    w3p = jnp.zeros((HP,), jnp.float32).at[:H2].set(w3[:, 0]).at[H2].set(b3[0])

    C = jnp.stack([c1p, c2p], axis=0)                          # [2, HP]  f32
    W3 = jnp.broadcast_to(w3p[None, :], (8, HP))               # sublane-aligned
    return (w1p.astype(weight_dtype), w2p.astype(weight_dtype),
            jnp.asarray(W3, weight_dtype), C)


# ---------------------------------------------------------------------------
# Plain-JAX references
# ---------------------------------------------------------------------------
def raw_reference(x, raw, *, eps=1e-5):
    """Unfused f32 reference of the original module forward (eval mode)."""
    HI = jax.lax.Precision.HIGHEST
    h = x
    for layer in raw["layers"]:
        h = jnp.dot(h, layer["w"], precision=HI) + layer["b"][None, :]
        scale = layer["gamma"] * jax.lax.rsqrt(layer["var"] + eps)
        h = (h - layer["mean"][None, :]) * scale[None, :] + layer["beta"][None, :]
        h = jnp.maximum(h, 0.0)
    return jnp.dot(h, raw["w_out"], precision=HI) + raw["b_out"][None, :]


def packed_reference(x, packed):
    """Plain-JAX emulation of exactly what the kernel computes (same casts)."""
    w1, w2, w3, C = packed
    dt = w1.dtype
    HI = jax.lax.Precision.HIGHEST
    h = jnp.dot(x.astype(dt), w1, preferred_element_type=jnp.float32, precision=HI)
    h = jnp.maximum(h + C[0:1], 0.0).astype(dt)
    h = jnp.dot(h, w2, preferred_element_type=jnp.float32, precision=HI)
    h = jnp.maximum(h + C[1:2], 0.0).astype(dt)
    return jnp.dot(h, w3[0:1].T, preferred_element_type=jnp.float32,
                   precision=HI)                               # [B, 1]


# ---------------------------------------------------------------------------
if __name__ == "__main__":
    key = jax.random.PRNGKey(0)
    k_x, k_x2, k_p = jax.random.split(key, 3)

    # Small, deterministic test shapes consistent with the module.
    F_IN = 64
    HIDDEN = (128, 64)
    raw = init_raw_params(k_p, F_IN, hidden=HIDDEN, out_size=1)

    # 1) Packing sanity (all-f32 fold/pad/bias-feature vs. the unfused module).
    packed_f32 = pack_params(raw, weight_dtype=jnp.float32)
    B = 8
    x = jax.random.normal(k_x, (B, F_IN), jnp.float32)
    ref_raw = raw_reference(x, raw)
    assert jnp.allclose(packed_reference(x, packed_f32), ref_raw,
                        atol=1e-3, rtol=1e-3), "BN-fold / padding mismatch"

    # 2) Fused Pallas kernel, bf16 MXU operands, f32 accumulation.
    packed = pack_params(raw, weight_dtype=jnp.bfloat16)
    out = jax.block_until_ready(fcnn_forward(x, packed))
    assert out.shape == (B, 1)
    assert jnp.allclose(out, packed_reference(x, packed),
                        atol=2e-3, rtol=2e-3), "kernel mismatch vs bf16 reference"
    assert jnp.allclose(out, ref_raw, atol=0.25, rtol=0.1), "kernel far from f32 reference"

    # 3) Multi-tile grid path: non-128-divisible batch (padded + sliced).
    B2 = 300
    x2 = jax.random.normal(k_x2, (B2, F_IN), jnp.float32)
    out2 = jax.block_until_ready(fcnn_forward(x2, packed))
    assert out2.shape == (B2, 1)
    assert jnp.allclose(out2, packed_reference(x2, packed),
                        atol=2e-3, rtol=2e-3), "multi-tile kernel mismatch"

    print("KERNEL_OK")
</pallas_src>

<mosaic_0001>
module attributes {stable_mosaic.version = 11 : i64} {
  func.func @_fcnn_kernel(%arg0: i32, %arg1: memref<128x64xf32, #tpu.memory_space<vmem>>, %arg2: memref<64x128xbf16, #tpu.memory_space<vmem>>, %arg3: memref<128x128xbf16, #tpu.memory_space<vmem>>, %arg4: memref<8x128xbf16, #tpu.memory_space<vmem>>, %arg5: memref<2x128xf32, #tpu.memory_space<vmem>>, %arg6: memref<1x128xf32, #tpu.memory_space<vmem>>) attributes {dimension_semantics = [#tpu.dimension_semantics<parallel>], iteration_bounds = array<i64: 1>, scalar_prefetch = 0 : i64, scratch_operands = 0 : i64, tpu.core_type = #tpu.core_type<tc>, window_params = [{transform_indices = @transform_0, window_bounds = array<i64: 128, 64>}, {pipeline_mode = #tpu.pipeline_mode<synchronous>, transform_indices = @transform_1, window_bounds = array<i64: 64, 128>}, {pipeline_mode = #tpu.pipeline_mode<synchronous>, transform_indices = @transform_2, window_bounds = array<i64: 128, 128>}, {pipeline_mode = #tpu.pipeline_mode<synchronous>, transform_indices = @transform_3, window_bounds = array<i64: 8, 128>}, {pipeline_mode = #tpu.pipeline_mode<synchronous>, transform_indices = @transform_4, window_bounds = array<i64: 2, 128>}, {transform_indices = @transform_5, window_bounds = array<i64: 1, 128>}]} {
    %c0 = arith.constant 0 : index
    %c0_0 = arith.constant 0 : index
    %0 = vector.load %arg1[%c0, %c0_0] : memref<128x64xf32, #tpu.memory_space<vmem>>, vector<128x64xf32>
    %1 = arith.truncf %0 : vector<128x64xf32> to vector<128x64xbf16>
    %c0_1 = arith.constant 0 : index
    %c0_2 = arith.constant 0 : index
    %2 = vector.load %arg2[%c0_1, %c0_2] : memref<64x128xbf16, #tpu.memory_space<vmem>>, vector<64x128xbf16>
    %cst = arith.constant dense<0.000000e+00> : vector<128x128xf32>
    %3 = tpu.matmul %1, %2, %cst {dimension_numbers = #tpu.dot_dimension_numbers<[1], [0], [0], [1], [0, 0, 1, 1], [], []>} : vector<128x64xbf16>, vector<64x128xbf16>, vector<128x128xf32> -> vector<128x128xf32>
    %c0_3 = arith.constant 0 : index
    %c0_4 = arith.constant 0 : index
    %4 = vector.load %arg5[%c0_3, %c0_4] : memref<2x128xf32, #tpu.memory_space<vmem>>, vector<1x128xf32>
    %5 = vector.broadcast %4 : vector<1x128xf32> to vector<128x128xf32>
    %6 = arith.addf %3, %5 : vector<128x128xf32>
    %cst_5 = arith.constant 0.000000e+00 : f32
    %7 = vector.broadcast %cst_5 : f32 to vector<128x128xf32>
    %8 = arith.maximumf %6, %7 : vector<128x128xf32>
    %9 = arith.truncf %8 : vector<128x128xf32> to vector<128x128xbf16>
    %c0_6 = arith.constant 0 : index
    %c0_7 = arith.constant 0 : index
    %10 = vector.load %arg3[%c0_6, %c0_7] : memref<128x128xbf16, #tpu.memory_space<vmem>>, vector<128x128xbf16>
    %cst_8 = arith.constant dense<0.000000e+00> : vector<128x128xf32>
    %11 = tpu.matmul %9, %10, %cst_8 {dimension_numbers = #tpu.dot_dimension_numbers<[1], [0], [0], [1], [0, 0, 1, 1], [], []>} : vector<128x128xbf16>, vector<128x128xbf16>, vector<128x128xf32> -> vector<128x128xf32>
    %c1 = arith.constant 1 : index
    %c0_9 = arith.constant 0 : index
    %12 = vector.load %arg5[%c1, %c0_9] : memref<2x128xf32, #tpu.memory_space<vmem>>, vector<1x128xf32>
    %13 = vector.broadcast %12 : vector<1x128xf32> to vector<128x128xf32>
    %14 = arith.addf %11, %13 : vector<128x128xf32>
    %cst_10 = arith.constant 0.000000e+00 : f32
    %15 = vector.broadcast %cst_10 : f32 to vector<128x128xf32>
    %16 = arith.maximumf %14, %15 : vector<128x128xf32>
    %17 = arith.truncf %16 : vector<128x128xf32> to vector<128x128xbf16>
    %c0_11 = arith.constant 0 : index
    %c0_12 = arith.constant 0 : index
    %18 = vector.load %arg4[%c0_11, %c0_12] : memref<8x128xbf16, #tpu.memory_space<vmem>>, vector<8x128xbf16>
    %cst_13 = arith.constant dense<0.000000e+00> : vector<8x128xf32>
    %19 = tpu.matmul %18, %17, %cst_13 {dimension_numbers = #tpu.dot_dimension_numbers<[1], [1], [0], [0], [0, 0, 1, 0], [], []>} : vector<8x128xbf16>, vector<128x128xbf16>, vector<8x128xf32> -> vector<8x128xf32>
    %20 = vector.extract_strided_slice %19 {offsets = [0, 0], sizes = [1, 128], strides = [1, 1]} : vector<8x128xf32> to vector<1x128xf32>
    %c0_14 = arith.constant 0 : index
    %c0_15 = arith.constant 0 : index
    %21 = vector.load %arg6[%c0_14, %c0_15] : memref<1x128xf32, #tpu.memory_space<vmem>>, vector<1x128xf32>
    tpu.vector_store %arg6[%c0_14, %c0_15], %20 {strides = array<i32>} : memref<1x128xf32, #tpu.memory_space<vmem>>, vector<1x128xf32>,
    return
  }
  func.func @transform_0(%arg0: i32) -> (i32, i32) {
    %c0_i32 = arith.constant 0 : i32
    %c0_i32_0 = arith.constant 0 : i32
    return %arg0, %c0_i32 : i32, i32
  }
  func.func @transform_1(%arg0: i32) -> (i32, i32) {
    %c0_i32 = arith.constant 0 : i32
    %c0_i32_0 = arith.constant 0 : i32
    %c0_i32_1 = arith.constant 0 : i32
    return %c0_i32, %c0_i32_0 : i32, i32
  }
  func.func @transform_2(%arg0: i32) -> (i32, i32) {
    %c0_i32 = arith.constant 0 : i32
    %c0_i32_0 = arith.constant 0 : i32
    %c0_i32_1 = arith.constant 0 : i32
    return %c0_i32, %c0_i32_0 : i32, i32
  }
  func.func @transform_3(%arg0: i32) -> (i32, i32) {
    %c0_i32 = arith.constant 0 : i32
    %c0_i32_0 = arith.constant 0 : i32
    %c0_i32_1 = arith.constant 0 : i32
    return %c0_i32, %c0_i32_0 : i32, i32
  }
  func.func @transform_4(%arg0: i32) -> (i32, i32) {
    %c0_i32 = arith.constant 0 : i32
    %c0_i32_0 = arith.constant 0 : i32
    %c0_i32_1 = arith.constant 0 : i32
    return %c0_i32, %c0_i32_0 : i32, i32
  }
  func.func @transform_5(%arg0: i32) -> (i32, i32) {
    %c0_i32 = arith.constant 0 : i32
    %c0_i32_0 = arith.constant 0 : i32
    return %c0_i32, %arg0 : i32, i32
  }
}

</mosaic_0001>

<llo_original>
// kernel: tpu_custom_call.1
$region0: #{tpu_custom_call.1}
  #allocation0 [shape = 'u32[]', space=smem, size = 0x4, offset = 0x4, fixed_abs, tag = 'smem constant byte address 0x4 - core index']
  #allocation1 [shape = 'u32[72,128]{1,0:T(1,128)}', space=vmem, size = 0x9000, scoped, tag = 'internal scratch']
  %s0 = inlined_call_operand.vmem [shape: f32[128,64], index: 0, kind: input, shape index: {}]
  %s1 = inlined_call_operand.vmem [shape: bf16[64,128], index: 1, kind: input, shape index: {}]
  %s2 = inlined_call_operand.vmem [shape: bf16[128,128], index: 2, kind: input, shape index: {}]
  %s3 = inlined_call_operand.vmem [shape: bf16[8,128], index: 3, kind: input, shape index: {}]
  %s4 = inlined_call_operand.vmem [shape: f32[2,128], index: 4, kind: input, shape index: {}]
  %s5 = inlined_call_operand.hbm [shape: f32[1,128], index: 5, kind: output, shape index: {}]
  %s6 = sld [smem:[#allocation0]]
  $region30: #{tpu_custom_call.1} parent=0
    _
  %s8 = ssub.s32 1, %s6
  %s9 = scalar_select 0, %s8, %s6
  $region1: #{tpu_custom_call.1} parent=0
    #allocation2 [shape = 'u8[512]{0}', space=vmem, size = 0x400, scoped, tag = 'output window, operand 0, single buffered']
    #allocation3 [shape = 's32[1]{0}', space=sflag, size = 0x4, scoped, tag = 'scoped memory for tpu_custom_call.1']
    %10 = vsyncpa [#allocation3], 0
    // Predicated region
    $region2: #{tpu_custom_call.1} parent=1 // pred_check
      _
    $region3: #{tpu_custom_call.1} parent=1 // pred_check_branch
      %12 = sbr.rel (0) target = $region5
    $region4: #{tpu_custom_call.1} parent=1 // pred_region
      _
    $region5: #{tpu_custom_call.1} parent=1 // pred_fallthru
      _
    // Predicated region
    $region6: #{tpu_custom_call.1} parent=1 // pred_check
      _
    $region7: #{tpu_custom_call.1} parent=1 // pred_check_branch
      %14 = sbr.rel (0) target = $region9
    $region8: #{tpu_custom_call.1} parent=1 // pred_region
      _
    $region9: #{tpu_custom_call.1} parent=1 // pred_fallthru
      _
    // Predicated region
    $region10: #{tpu_custom_call.1} parent=1 // pred_check
      _
    $region11: #{tpu_custom_call.1} parent=1 // pred_check_branch
      %16 = sbr.rel (0) target = $region13
    $region12: #{tpu_custom_call.1} parent=1 // pred_region
      _
    $region13: #{tpu_custom_call.1} parent=1 // pred_fallthru
      _
    // Predicated region
    $region14: #{tpu_custom_call.1} parent=1 // pred_check
      _
    $region15: #{tpu_custom_call.1} parent=1 // pred_check_branch
      %18 = sbr.rel (0) target = $region17
    $region16: #{tpu_custom_call.1} parent=1 // pred_region
      _
    $region17: #{tpu_custom_call.1} parent=1 // pred_fallthru
      _
    // Predicated region
    $region18: #{tpu_custom_call.1} parent=1 // pred_check
      _
    $region19: #{tpu_custom_call.1} parent=1 // pred_check_branch
      %20 = sbr.rel (0) target = $region21
    $region20: #{tpu_custom_call.1} parent=1 // pred_region
      _
    $region21: #{tpu_custom_call.1} parent=1 // pred_fallthru
      _
    %v22 = vld [vmem:[%s0] sm:$0xff]
    %v23 = vld [vmem:[%s0 + $0x8] sm:$0xff]
    %v24 = vld [vmem:[%s0 + $0x10] sm:$0xff]
    %v25 = vld [vmem:[%s0 + $0x18] sm:$0xff]
    %v26 = vld [vmem:[%s0 + $0x20] sm:$0xff]
    %v27 = vld [vmem:[%s0 + $0x28] sm:$0xff]
    %v28 = vld [vmem:[%s0 + $0x30] sm:$0xff]
    %v29 = vld [vmem:[%s0 + $0x38] sm:$0xff]
    %v30 = vld [vmem:[%s0 + $0x40] sm:$0xff]
    %v31 = vld [vmem:[%s0 + $0x48] sm:$0xff]
    %v32 = vld [vmem:[%s0 + $0x50] sm:$0xff]
    %v33 = vld [vmem:[%s0 + $0x58] sm:$0xff]
    %v34 = vld [vmem:[%s0 + $0x60] sm:$0xff]
    %v35 = vld [vmem:[%s0 + $0x68] sm:$0xff]
    %v36 = vld [vmem:[%s0 + $0x70] sm:$0xff]
    %v37 = vld [vmem:[%s0 + $0x78] sm:$0xff]
    %v38 = vpack.c.bf16 %v23, %v22
    %v39 = vpack.c.bf16 %v25, %v24
    %v40 = vpack.c.bf16 %v27, %v26
    %v41 = vpack.c.bf16 %v29, %v28
    %v42 = vpack.c.bf16 %v31, %v30
    %v43 = vpack.c.bf16 %v33, %v32
    %v44 = vpack.c.bf16 %v35, %v34
    %v45 = vpack.c.bf16 %v37, %v36
    %v46 = vld [vmem:[%s1] sm:$0xf]
    %v47 = vld [vmem:[%s1 + $0x4] sm:$0xf]
    %v48 = vld [vmem:[%s1 + $0x8] sm:$0xf]
    %v49 = vld [vmem:[%s1 + $0xc] sm:$0xf]
    %v50 = vld [vmem:[%s1 + $0x10] sm:$0xf]
    %v51 = vld [vmem:[%s1 + $0x14] sm:$0xf]
    %v52 = vld [vmem:[%s1 + $0x18] sm:$0xf]
    %v53 = vld [vmem:[%s1 + $0x1c] sm:$0xf]
    %v54 = vld [vmem:[%s4] sm:$0x1]
    %v55 = vperm.slane %v54, 0
    %v64 = vunpack.c.l.b16 %v46
    %v65 = vunpack.c.l.b16 %v47
    %v66 = vunpack.c.l.b16 %v48
    %v67 = vunpack.c.l.b16 %v49
    %v68 = vunpack.c.l.b16 %v50
    %v69 = vunpack.c.l.b16 %v51
    %v70 = vunpack.c.l.b16 %v52
    %v71 = vunpack.c.l.b16 %v53
    %v72 = vpack.c.b16 %v65, %v64
    %v73 = vpack.c.b16 %v67, %v66
    %v74 = vpack.c.b16 %v69, %v68
    %v75 = vpack.c.b16 %v71, %v70
    %vm80 = vcmask 523264
    %v82 = vsel %vm80, %v38, 0
    %v85 = vsel %vm80, %v39, 0
    %v88 = vsel %vm80, %v40, 0
    %v91 = vsel %vm80, %v41, 0
    %v94 = vsel %vm80, %v42, 0
    %v97 = vsel %vm80, %v43, 0
    %v100 = vsel %vm80, %v44, 0
    %v103 = vsel %vm80, %v45, 0
    %105 = vmatpush.bf16.msra.mxu0 0
    %106 = vmatpush.bf16.msra.mxu0 0
    %107 = vmatpush.bf16.msra.mxu0 0
    %108 = vmatpush.bf16.msra.mxu0 0
    %109 = vmatpush.bf16.msra.mxu0 %v75
    %110 = vmatpush.bf16.msra.mxu0 %v74
    %111 = vmatpush.bf16.msra.mxu0 %v73
    %112 = vmatpush.bf16.msra.mxu0 %v72
    %113 = vmatmul.bf16.gmra.mxu0 %v82
    %v114 = vpop.f32.mrf.mxu0
    %v115 = vadd.f32 %v55, %v114
    %v116 = vpop.f32.mrf.mxu0
    %v117 = vadd.f32 %v55, %v116
    %118 = vmatmul.bf16.gmra.mxu0 %v85
    %v119 = vpop.f32.mrf.mxu0
    %v120 = vadd.f32 %v55, %v119
    %v121 = vpop.f32.mrf.mxu0
    %v122 = vadd.f32 %v55, %v121
    %123 = vmatmul.bf16.gmra.mxu0 %v88
    %v124 = vpop.f32.mrf.mxu0
    %v125 = vadd.f32 %v55, %v124
    %v126 = vpop.f32.mrf.mxu0
    %v127 = vadd.f32 %v55, %v126
    %128 = vmatmul.bf16.gmra.mxu0 %v91
    %v129 = vpop.f32.mrf.mxu0
    %v130 = vadd.f32 %v55, %v129
    %v131 = vpop.f32.mrf.mxu0
    %v132 = vadd.f32 %v55, %v131
    %133 = vmatmul.bf16.gmra.mxu0 %v94
    %v134 = vpop.f32.mrf.mxu0
    %v135 = vadd.f32 %v55, %v134
    %v136 = vpop.f32.mrf.mxu0
    %v137 = vadd.f32 %v55, %v136
    %138 = vmatmul.bf16.gmra.mxu0 %v97
    %v139 = vpop.f32.mrf.mxu0
    %v140 = vadd.f32 %v55, %v139
    %v141 = vpop.f32.mrf.mxu0
    %v142 = vadd.f32 %v55, %v141
    %143 = vmatmul.bf16.gmra.mxu0 %v100
    %v144 = vpop.f32.mrf.mxu0
    %v145 = vadd.f32 %v55, %v144
    %v146 = vpop.f32.mrf.mxu0
    %v147 = vadd.f32 %v55, %v146
    %148 = vmatmul.bf16.gmra.mxu0 %v103
    %v149 = vpop.f32.mrf.mxu0
    %v150 = vadd.f32 %v55, %v149
    %v151 = vpop.f32.mrf.mxu0
    %v152 = vadd.f32 %v55, %v151
    %153 = vdwg.mxu0
    %v154 = vmax.f32 %v115, 0.0
    %v155 = vmax.f32 %v117, 0.0
    %v156 = vmax.f32 %v120, 0.0
    %v157 = vmax.f32 %v122, 0.0
    %v158 = vmax.f32 %v125, 0.0
    %v159 = vmax.f32 %v127, 0.0
    %v160 = vmax.f32 %v130, 0.0
    %v161 = vmax.f32 %v132, 0.0
    %v162 = vmax.f32 %v135, 0.0
    %v163 = vmax.f32 %v137, 0.0
    %v164 = vmax.f32 %v140, 0.0
    %v165 = vmax.f32 %v142, 0.0
    %v166 = vmax.f32 %v145, 0.0
    %v167 = vmax.f32 %v147, 0.0
    %v168 = vmax.f32 %v150, 0.0
    %v169 = vmax.f32 %v152, 0.0
    %v170 = vpack.c.bf16 %v155, %v154
    %v171 = vpack.c.bf16 %v157, %v156
    %v172 = vpack.c.bf16 %v159, %v158
    %v173 = vpack.c.bf16 %v161, %v160
    %v174 = vpack.c.bf16 %v163, %v162
    %v175 = vpack.c.bf16 %v165, %v164
    %v176 = vpack.c.bf16 %v167, %v166
    %v177 = vpack.c.bf16 %v169, %v168
    %v178 = vld [vmem:[%s2] sm:$0xf]
    %v179 = vld [vmem:[%s2 + $0x4] sm:$0xf]
    %v180 = vld [vmem:[%s2 + $0x8] sm:$0xf]
    %v181 = vld [vmem:[%s2 + $0xc] sm:$0xf]
    %v182 = vld [vmem:[%s2 + $0x10] sm:$0xf]
    %v183 = vld [vmem:[%s2 + $0x14] sm:$0xf]
    %v184 = vld [vmem:[%s2 + $0x18] sm:$0xf]
    %v185 = vld [vmem:[%s2 + $0x1c] sm:$0xf]
    %v186 = vld [vmem:[%s2 + $0x20] sm:$0xf]
    %v187 = vld [vmem:[%s2 + $0x24] sm:$0xf]
    %v188 = vld [vmem:[%s2 + $0x28] sm:$0xf]
    %v189 = vld [vmem:[%s2 + $0x2c] sm:$0xf]
    %v190 = vld [vmem:[%s2 + $0x30] sm:$0xf]
    %v191 = vld [vmem:[%s2 + $0x34] sm:$0xf]
    %v192 = vld [vmem:[%s2 + $0x38] sm:$0xf]
    %v193 = vld [vmem:[%s2 + $0x3c] sm:$0xf]
    %v194 = vld [vmem:[%s4 + $0x1] sm:$0x1]
    %v195 = vperm.slane %v194, 0
    %v212 = vunpack.c.l.b16 %v178
    %v213 = vunpack.c.l.b16 %v179
    %v214 = vunpack.c.l.b16 %v180
    %v215 = vunpack.c.l.b16 %v181
    %v216 = vunpack.c.l.b16 %v182
    %v217 = vunpack.c.l.b16 %v183
    %v218 = vunpack.c.l.b16 %v184
    %v219 = vunpack.c.l.b16 %v185
    %v220 = vunpack.c.l.b16 %v186
    %v221 = vunpack.c.l.b16 %v187
    %v222 = vunpack.c.l.b16 %v188
    %v223 = vunpack.c.l.b16 %v189
    %v224 = vunpack.c.l.b16 %v190
    %v225 = vunpack.c.l.b16 %v191
    %v226 = vunpack.c.l.b16 %v192
    %v227 = vunpack.c.l.b16 %v193
    %v228 = vpack.c.b16 %v213, %v212
    %v229 = vpack.c.b16 %v215, %v214
    %v230 = vpack.c.b16 %v217, %v216
    %v231 = vpack.c.b16 %v219, %v218
    %v232 = vpack.c.b16 %v221, %v220
    %v233 = vpack.c.b16 %v223, %v222
    %v234 = vpack.c.b16 %v225, %v224
    %v235 = vpack.c.b16 %v227, %v226
    %244 = vmatpush.bf16.msra.mxu0 %v235
    %245 = vmatpush.bf16.msra.mxu0 %v234
    %246 = vmatpush.bf16.msra.mxu0 %v233
    %247 = vmatpush.bf16.msra.mxu0 %v232
    %248 = vmatpush.bf16.msra.mxu0 %v231
    %249 = vmatpush.bf16.msra.mxu0 %v230
    %250 = vmatpush.bf16.msra.mxu0 %v229
    %251 = vmatpush.bf16.msra.mxu0 %v228
    %252 = vmatmul.bf16.gmra.mxu0 %v170
    %v253 = vpop.f32.mrf.mxu0
    %v254 = vadd.f32 %v195, %v253
    %v255 = vpop.f32.mrf.mxu0
    %v256 = vadd.f32 %v195, %v255
    %257 = vmatmul.bf16.gmra.mxu0 %v171
    %v258 = vpop.f32.mrf.mxu0
    %v259 = vadd.f32 %v195, %v258
    %v260 = vpop.f32.mrf.mxu0
    %v261 = vadd.f32 %v195, %v260
    %262 = vmatmul.bf16.gmra.mxu0 %v172
    %v263 = vpop.f32.mrf.mxu0
    %v264 = vadd.f32 %v195, %v263
    %v265 = vpop.f32.mrf.mxu0
    %v266 = vadd.f32 %v195, %v265
    %267 = vmatmul.bf16.gmra.mxu0 %v173
    %v268 = vpop.f32.mrf.mxu0
    %v269 = vadd.f32 %v195, %v268
    %v270 = vpop.f32.mrf.mxu0
    %v271 = vadd.f32 %v195, %v270
    %272 = vmatmul.bf16.gmra.mxu0 %v174
    %v273 = vpop.f32.mrf.mxu0
    %v274 = vadd.f32 %v195, %v273
    %v275 = vpop.f32.mrf.mxu0
    %v276 = vadd.f32 %v195, %v275
    %277 = vmatmul.bf16.gmra.mxu0 %v175
    %v278 = vpop.f32.mrf.mxu0
    %v279 = vadd.f32 %v195, %v278
    %v280 = vpop.f32.mrf.mxu0
    %v281 = vadd.f32 %v195, %v280
    %282 = vmatmul.bf16.gmra.mxu0 %v176
    %v283 = vpop.f32.mrf.mxu0
    %v284 = vadd.f32 %v195, %v283
    %v285 = vpop.f32.mrf.mxu0
    %v286 = vadd.f32 %v195, %v285
    %287 = vmatmul.bf16.gmra.mxu0 %v177
    %v288 = vpop.f32.mrf.mxu0
    %v289 = vadd.f32 %v195, %v288
    %v290 = vpop.f32.mrf.mxu0
    %v291 = vadd.f32 %v195, %v290
    %292 = vdwg.mxu0
    %v293 = vmax.f32 %v254, 0.0
    %v294 = vmax.f32 %v256, 0.0
    %v295 = vmax.f32 %v259, 0.0
    %v296 = vmax.f32 %v261, 0.0
    %v297 = vmax.f32 %v264, 0.0
    %v298 = vmax.f32 %v266, 0.0
    %v299 = vmax.f32 %v269, 0.0
    %v300 = vmax.f32 %v271, 0.0
    %v301 = vmax.f32 %v274, 0.0
    %v302 = vmax.f32 %v276, 0.0
    %v303 = vmax.f32 %v279, 0.0
    %v304 = vmax.f32 %v281, 0.0
    %v305 = vmax.f32 %v284, 0.0
    %v306 = vmax.f32 %v286, 0.0
    %v307 = vmax.f32 %v289, 0.0
    %v308 = vmax.f32 %v291, 0.0
    %v309 = vpack.c.bf16 %v294, %v293
    %v310 = vpack.c.bf16 %v296, %v295
    %v311 = vpack.c.bf16 %v298, %v297
    %v312 = vpack.c.bf16 %v300, %v299
    %v313 = vpack.c.bf16 %v302, %v301
    %v314 = vpack.c.bf16 %v304, %v303
    %v315 = vpack.c.bf16 %v306, %v305
    %v316 = vpack.c.bf16 %v308, %v307
    %v317 = vld [vmem:[%s3] sm:$0xf]
    %318 = vmatpush.bf16.xpose.msra.mxu0 %v316
    %319 = vmatpush.bf16.xpose.msra.mxu0 %v315
    %320 = vmatpush.bf16.xpose.msra.mxu0 %v314
    %321 = vmatpush.bf16.xpose.msra.mxu0 %v313
    %322 = vmatpush.bf16.xpose.msra.mxu0 %v312
    %323 = vmatpush.bf16.xpose.msra.mxu0 %v311
    %324 = vmatpush.bf16.xpose.msra.mxu0 %v310
    %325 = vmatpush.bf16.xpose.msra.mxu0 %v309
    %326 = vmatmul.bf16.gmra.mxu0 %v317
    %v327 = vpop.f32.mrf.mxu0
    %v328 = vadd.f32 0.0, %v327
    %v329 = vpop.f32.mrf.mxu0
    %330 = vdwg.mxu0
    %331 = vst [vmem:[#allocation2] sm:$0x1] %v328
    // Predicated region
    $region22: #{tpu_custom_call.1} parent=1 // pred_check
      _
    $region23: #{tpu_custom_call.1} parent=1 // pred_check_branch
      %333 = sbr.rel (0) target = $region25
    $region24: #{tpu_custom_call.1} parent=1 // pred_region
      %335 = vsyncadd [#allocation3], 0
      %s337 = sshll.u32 [#allocation2], 4
      %s338 = int_to_ptr.vmem [resolvable:$true] %s337
      %s339 = sshll.u32 %s5, 4
      %s340 = int_to_ptr.hbm [resolvable:$true] %s339
      %342 = dma.vmem_to_hbm [thread:$0]  %s338, 16, %s340, [#allocation3]
    $region25: #{tpu_custom_call.1} parent=1 // pred_fallthru
      _
    // Predicated region
    $region26: #{tpu_custom_call.1} parent=1 // pred_check
      _
    $region27: #{tpu_custom_call.1} parent=1 // pred_check_branch
      %344 = sbr.rel (0) target = $region29
    $region28: #{tpu_custom_call.1} parent=1 // pred_region
      %346 = dma.done [#allocation3], 16
    $region29: #{tpu_custom_call.1} parent=1 // pred_fallthru
      _
    %347 = vsyncpa [#allocation3], 1

</llo_original>
